<compile_context>
chip_gen: v5e
topology: v5e:2x2
jax: 0.10.0
libtpu: 0.0.40
codegen_flags: <defaults>
</compile_context>

<pallas_src>
import jax
import jax.numpy as jnp
from jax import lax
from jax.experimental import pallas as pl
from jax.experimental.pallas import tpu as pltpu

IN_FEATURES = 19 * 4   # 76
OUT_FEATURES = 2

_DEFAULT_BATCH_TILE = 1024  # rows per grid step; multiple of 8 (f32 sublane)


def _refine_kernel(x_ref, w_ref, o_ref):
    # x_ref: [TB, 76], w_ref: [2, 76]  (PyTorch [out, in] layout, untransposed).
    # Contract the feature axis of both operands -> [TB, 2].
    o_ref[...] = lax.dot_general(
        x_ref[...],
        w_ref[...],
        dimension_numbers=(((1,), (1,)), ((), ())),
        preferred_element_type=jnp.float32,
    ).astype(o_ref.dtype)


def _choose_batch_tile(B, cap=_DEFAULT_BATCH_TILE):
    # Largest multiple of 8 that covers B, capped at `cap`.
    tb = ((min(B, cap) + 7) // 8) * 8
    return max(tb, 8)


def refine_forward(x, weight, *, batch_tile=None):
    """Forward pass of RefineModel.

    Args:
      x: [B, 76] float32 input.
      weight: [2, 76] float32 linear weight (PyTorch layout: [out, in]).
      batch_tile: optional override for the batch tile size (multiple of 8).

    Returns:
      [B, 2] float32 output, equal to x @ weight.T
    """
    B, F = x.shape
    assert F == IN_FEATURES
    assert weight.shape == (OUT_FEATURES, IN_FEATURES)

    tb = batch_tile if batch_tile is not None else _choose_batch_tile(B)
    grid = (pl.cdiv(B, tb),)

    return pl.pallas_call(
        _refine_kernel,
        out_shape=jax.ShapeDtypeStruct((B, OUT_FEATURES), x.dtype),
        grid_spec=pl.GridSpec(
            grid=grid,
            in_specs=[
                # Stream x in batch tiles (double-buffered by the pipeline).
                pl.BlockSpec((tb, IN_FEATURES), lambda i: (i, 0)),
                # Weight: single full-array block, constant index -> stays
                # VMEM-resident across all grid steps.
                pl.BlockSpec((OUT_FEATURES, IN_FEATURES), lambda i: (0, 0)),
            ],
            out_specs=pl.BlockSpec((tb, OUT_FEATURES), lambda i: (i, 0)),
        ),
        compiler_params=pltpu.CompilerParams(
            # Independent batch tiles -> shard across v7x's 2 TensorCores.
            dimension_semantics=("parallel",),
            # Explicit, generation-safe VMEM budget (usage is ~1-2 MiB).
            vmem_limit_bytes=32 * 1024 * 1024,
        ),
    )(x, weight)


def make_refine_weight(bilateral_lm_idx, key):
    """Deterministic re-implementation of RefineModel.__init__ weight init."""
    n = len(bilateral_lm_idx)
    w = jnp.zeros((OUT_FEATURES, IN_FEATURES), dtype=jnp.float32)
    for i, lm_idx in enumerate(bilateral_lm_idx):
        w = w.at[i, lm_idx].set(0.5)
        w = w.at[i, 19 + lm_idx].set(0.5)
        w = w.at[i + n, 38 + lm_idx].set(0.5)
        w = w.at[i + n, 57 + lm_idx].set(0.5)
    # torch.rand_like -> uniform [0, 1); reproduced with jax.random.uniform
    # (deterministic, but not bitwise-identical to the torch RNG stream).
    noise = 0.001 * jax.random.uniform(
        key, (OUT_FEATURES, IN_FEATURES), dtype=jnp.float32
    )
    return w + noise


if __name__ == "__main__":
    key = jax.random.PRNGKey(0)
    k_w, k_x = jax.random.split(key)

    # out_features=2 implies len(bilateral_lm_idx) == 1.
    bilateral_lm_idx = [3]
    weight = make_refine_weight(bilateral_lm_idx, k_w)

    # Small batch, single tile.
    B = 8
    x = jax.random.normal(k_x, (B, IN_FEATURES), dtype=jnp.float32)
    out = jax.block_until_ready(refine_forward(x, weight))
    ref = x @ weight.T
    assert out.shape == (B, OUT_FEATURES)
    assert jnp.allclose(out, ref, atol=1e-5, rtol=1e-5)

    # Multi-tile grid with a partial last tile (exercises the batch tiling).
    B2 = 20
    x2 = jax.random.normal(jax.random.PRNGKey(1), (B2, IN_FEATURES), dtype=jnp.float32)
    out2 = jax.block_until_ready(refine_forward(x2, weight, batch_tile=8))
    assert out2.shape == (B2, OUT_FEATURES)
    assert jnp.allclose(out2, x2 @ weight.T, atol=1e-5, rtol=1e-5)

    print("KERNEL_OK")
</pallas_src>

<mosaic_0001>
module attributes {stable_mosaic.version = 11 : i64} {
  func.func @_refine_kernel(%arg0: i32, %arg1: memref<8x76xf32, #tpu.memory_space<vmem>>, %arg2: memref<2x76xf32, #tpu.memory_space<vmem>>, %arg3: memref<8x2xf32, #tpu.memory_space<vmem>>) attributes {dimension_semantics = [#tpu.dimension_semantics<parallel>], iteration_bounds = array<i64: 1>, scalar_prefetch = 0 : i64, scratch_operands = 0 : i64, tpu.core_type = #tpu.core_type<tc>, window_params = [{transform_indices = @transform_0, window_bounds = array<i64: 8, 76>}, {pipeline_mode = #tpu.pipeline_mode<synchronous>, transform_indices = @transform_1, window_bounds = array<i64: 2, 76>}, {transform_indices = @transform_2, window_bounds = array<i64: 8, 2>}]} {
    %c0 = arith.constant 0 : index
    %c0_0 = arith.constant 0 : index
    %0 = vector.load %arg1[%c0, %c0_0] : memref<8x76xf32, #tpu.memory_space<vmem>>, vector<8x76xf32>
    %c0_1 = arith.constant 0 : index
    %c0_2 = arith.constant 0 : index
    %1 = vector.load %arg2[%c0_1, %c0_2] : memref<2x76xf32, #tpu.memory_space<vmem>>, vector<2x76xf32>
    %cst = arith.constant dense<0.000000e+00> : vector<8x2xf32>
    %2 = tpu.matmul %0, %1, %cst {dimension_numbers = #tpu.dot_dimension_numbers<[1], [1], [0], [0], [0, 0, 1, 0], [], []>} : vector<8x76xf32>, vector<2x76xf32>, vector<8x2xf32> -> vector<8x2xf32>
    %c0_3 = arith.constant 0 : index
    %c0_4 = arith.constant 0 : index
    %3 = vector.load %arg3[%c0_3, %c0_4] : memref<8x2xf32, #tpu.memory_space<vmem>>, vector<8x2xf32>
    tpu.vector_store %arg3[%c0_3, %c0_4], %2 {strides = array<i32>} : memref<8x2xf32, #tpu.memory_space<vmem>>, vector<8x2xf32>,
    return
  }
  func.func @transform_0(%arg0: i32) -> (i32, i32) {
    %c0_i32 = arith.constant 0 : i32
    %c0_i32_0 = arith.constant 0 : i32
    return %arg0, %c0_i32 : i32, i32
  }
  func.func @transform_1(%arg0: i32) -> (i32, i32) {
    %c0_i32 = arith.constant 0 : i32
    %c0_i32_0 = arith.constant 0 : i32
    %c0_i32_1 = arith.constant 0 : i32
    return %c0_i32, %c0_i32_0 : i32, i32
  }
  func.func @transform_2(%arg0: i32) -> (i32, i32) {
    %c0_i32 = arith.constant 0 : i32
    %c0_i32_0 = arith.constant 0 : i32
    return %arg0, %c0_i32 : i32, i32
  }
}

</mosaic_0001>

<llo_original>
// kernel: tpu_custom_call.1
$region0: #{tpu_custom_call.1}
  #allocation0 [shape = 'u32[]', space=smem, size = 0x4, offset = 0x4, fixed_abs, tag = 'smem constant byte address 0x4 - core index']
  #allocation1 [shape = 'u32[72,128]{1,0:T(1,128)}', space=vmem, size = 0x9000, scoped, tag = 'internal scratch']
  %s0 = inlined_call_operand.hbm [shape: f32[8,76], index: 0, kind: input, shape index: {}]
  %s1 = inlined_call_operand.hbm [shape: f32[2,76], index: 1, kind: input, shape index: {}]
  %s2 = inlined_call_operand.vmem [shape: f32[8,2], index: 2, kind: output, shape index: {}]
  %s3 = sld [smem:[#allocation0]]
  $region26: #{tpu_custom_call.1} parent=0
    _
  %s5 = ssub.s32 1, %s3
  %s6 = scalar_select 0, %s5, %s3
  $region1: #{tpu_custom_call.1} parent=0
    #allocation2 [shape = 'u8[4096]{0}', space=vmem, size = 0x1000, scoped, tag = 'input window, operand 0, single buffered']
    #allocation3 [shape = 's32[1]{0}', space=sflag, size = 0x4, scoped, tag = 'scoped memory for tpu_custom_call.1']
    #allocation4 [shape = 'u8[1024]{0}', space=vmem, size = 0x400, scoped, tag = 'input window, operand 1, single buffered']
    #allocation5 [shape = 's32[1]{0}', space=sflag, size = 0x4, scoped, tag = 'scoped memory for tpu_custom_call.1']
    %7 = vsyncpa [#allocation3], 0
    %8 = vsyncpa [#allocation5], 0
    // Predicated region
    $region2: #{tpu_custom_call.1} parent=1 // pred_check
      _
    $region3: #{tpu_custom_call.1} parent=1 // pred_check_branch
      %10 = sbr.rel (0) target = $region5
    $region4: #{tpu_custom_call.1} parent=1 // pred_region
      %12 = vsyncadd [#allocation3], 0
      %s14 = sshll.u32 %s0, 4
      %s15 = int_to_ptr.hbm [resolvable:$true] %s14
      %s16 = sshll.u32 [#allocation2], 4
      %s17 = int_to_ptr.vmem [resolvable:$true] %s16
      %19 = dma.hbm_to_vmem [thread:$0]  %s15, 128, %s17, [#allocation3]
    $region5: #{tpu_custom_call.1} parent=1 // pred_fallthru
      _
    // Predicated region
    $region6: #{tpu_custom_call.1} parent=1 // pred_check
      _
    $region7: #{tpu_custom_call.1} parent=1 // pred_check_branch
      %21 = sbr.rel (0) target = $region9
    $region8: #{tpu_custom_call.1} parent=1 // pred_region
      %23 = vsyncadd [#allocation5], 0
      %s25 = sshll.u32 %s1, 4
      %s26 = int_to_ptr.hbm [resolvable:$true] %s25
      %s27 = sshll.u32 [#allocation4], 4
      %s28 = int_to_ptr.vmem [resolvable:$true] %s27
      %30 = dma.hbm_to_vmem [thread:$0]  %s26, 32, %s28, [#allocation5]
    $region9: #{tpu_custom_call.1} parent=1 // pred_fallthru
      _
    // Predicated region
    $region10: #{tpu_custom_call.1} parent=1 // pred_check
      _
    $region11: #{tpu_custom_call.1} parent=1 // pred_check_branch
      %32 = sbr.rel (0) target = $region13
    $region12: #{tpu_custom_call.1} parent=1 // pred_region
      %34 = dma.done [#allocation3], 128
    $region13: #{tpu_custom_call.1} parent=1 // pred_fallthru
      _
    // Predicated region
    $region14: #{tpu_custom_call.1} parent=1 // pred_check
      _
    $region15: #{tpu_custom_call.1} parent=1 // pred_check_branch
      %36 = sbr.rel (0) target = $region17
    $region16: #{tpu_custom_call.1} parent=1 // pred_region
      %38 = dma.done [#allocation5], 32
    $region17: #{tpu_custom_call.1} parent=1 // pred_fallthru
      _
    %v39 = vld [vmem:[#allocation2] sm:$0xff]
    %v40 = vld [vmem:[#allocation4] sm:$0x3]
    %vm41 = vcmask 621568
    %v43 = vsel %vm41, %v39, 0
    %v46 = vsel %vm41, %v40, 0
    %48 = vmatpush.xpose.msra.mxu0 0.0
    %49 = vmatpush.xpose.msra.mxu0 0.0
    %50 = vmatpush.xpose.msra.mxu0 0.0
    %51 = vmatpush.xpose.msra.mxu0 0.0
    %52 = vmatpush.xpose.msra.mxu0 0.0
    %53 = vmatpush.xpose.msra.mxu0 0.0
    %54 = vmatpush.xpose.msra.mxu0 0.0
    %55 = vmatpush.xpose.msra.mxu0 0.0
    %56 = vmatpush.xpose.msra.mxu0 0.0
    %57 = vmatpush.xpose.msra.mxu0 0.0
    %58 = vmatpush.xpose.msra.mxu0 0.0
    %59 = vmatpush.xpose.msra.mxu0 0.0
    %60 = vmatpush.xpose.msra.mxu0 0.0
    %61 = vmatpush.xpose.msra.mxu0 0.0
    %62 = vmatpush.xpose.msra.mxu0 0.0
    %63 = vmatpush.xpose.msra.mxu0 %v46
    %64 = vmatmul.f32.gmra.mxu0 %v43
    %v65 = vpop.f32.mrf.mxu0
    %v66 = vadd.f32 0.0, %v65
    %67 = vdwg.mxu0
    %vm68 = vcmask 15360
    %69 = vst.msk [vmem:[%s2] sm:$0xff] %vm68, %v66
    // Predicated region
    $region18: #{tpu_custom_call.1} parent=1 // pred_check
      _
    $region19: #{tpu_custom_call.1} parent=1 // pred_check_branch
      %71 = sbr.rel (0) target = $region21
    $region20: #{tpu_custom_call.1} parent=1 // pred_region
      _
    $region21: #{tpu_custom_call.1} parent=1 // pred_fallthru
      _
    // Predicated region
    $region22: #{tpu_custom_call.1} parent=1 // pred_check
      _
    $region23: #{tpu_custom_call.1} parent=1 // pred_check_branch
      %73 = sbr.rel (0) target = $region25
    $region24: #{tpu_custom_call.1} parent=1 // pred_region
      _
    $region25: #{tpu_custom_call.1} parent=1 // pred_fallthru
      _
    %74 = vsyncpa [#allocation3], 1
    %75 = vsyncpa [#allocation5], 1

</llo_original>
